<compile_context>
chip_gen: v5e
topology: v5e:2x2
jax: 0.10.0
libtpu: 0.0.40
codegen_flags: <defaults>
</compile_context>

<pallas_src>
import math
import jax
import jax.numpy as jnp
from jax import lax
from jax.experimental import pallas as pl
from jax.experimental.pallas import tpu as pltpu

# ----------------------------- configuration --------------------------------
INPUT_DIM = 3          # args.input_dim
ZDIM = 16              # args.zdim
HIDDEN = 32            # synthetic encoder / flow hidden width
NUM_POINTS = 64        # small stand-in for num_points=1024
BATCH = 2

PRIOR_WEIGHT = 1.0     # args.prior_weight
RECON_WEIGHT = 1.0     # args.recon_weight
ENTROPY_WEIGHT = 1.0   # args.entropy_weight

USE_DETERMINISTIC_ENCODER = True   # z = z_mu + 0 * z_sigma, entropy = zeros(B)
USE_LATENT_FLOW = False            # latent_cnf = nn.Sequential() in reference

LOG2PI = math.log(2.0 * math.pi)


# ------------------------------ fused Pallas kernel ---------------------------
def make_fused_kernel(B, N, D, H):
    """Encoder + conditional point flow + logprob reduction, fully fused.

    # TODO(synk): the reference uses a DGCNN (k-NN edge-conv) encoder and an
    # ODE-integrated CNF decoder; neither has a clean small-kernel equivalent.
    # They are replaced by a PointNet-style per-point MLP + global max-pool
    # encoder and a deterministic conditional per-point MLP producing
    # (y, delta_log_py) with the reference shapes.
    """
    BN = B * N
    # standard_normal_logprob constant: -0.5*D*log(2*pi) per element, summed
    # over the N*D elements of each cloud.  NOTE: this reproduces the
    # reference's dim-scaled constant, which is NOT the textbook per-element
    # -0.5*log(2*pi) — do not "fix" it.
    const_total = (-0.5 * D * LOG2PI) * float(N * D)
    base = RECON_WEIGHT * (-const_total)     # additive part of recon_loss
    c_sq = RECON_WEIGHT * 0.5 / B            # weight on sum(y^2)
    c_dl = RECON_WEIGHT / B                  # weight on sum(delta_log_py)

    def kernel(x_ref, w1_ref, wz_ref, w23_ref, b23_ref, recon_ref):
        x = x_ref[...]                                             # (D+1, BN)

        # ---- fused x-path matmul (encoder hidden + flow x-path hidden):
        # rows [0:H]  = enc_w1^T @ x + enc_b1
        # rows [H:2H] = cnf_w1^T @ x + (enc_bmu@cnf_wz + cnf_b1)  (z-path bias)
        t = jnp.dot(w1_ref[...], x, preferred_element_type=jnp.float32)  # (2H, BN)
        he = jnp.maximum(t[:H, :], 0.0)                            # (H, BN)
        hx = t[H:, :]                                              # (H, BN)

        # ---- per-cloud max-pool, broadcast straight back onto the lane axis
        # (masked segment max: no concatenate / broadcast_to materialization).
        lane = lax.broadcasted_iota(jnp.int32, (H, BN), 1)
        feats_full = jnp.zeros((H, BN), jnp.float32)
        for b in range(B):
            m = (lane >= b * N) & (lane < (b + 1) * N)
            mx = jnp.max(jnp.where(m, he, -jnp.inf), axis=1, keepdims=True)
            feats_full = jnp.where(m, mx, feats_full)

        # ---- z path folded into one matmul:  hz = (enc_wmu@cnf_wz)^T @ feats
        # (z itself is consumed nowhere else; z_new = z + (log_pz*0).mean() == z)
        hz = jnp.dot(wz_ref[...], feats_full,
                     preferred_element_type=jnp.float32)           # (H, BN)
        h = jnp.tanh(hx + hz)                                      # (H, BN)

        # ---- fused output head: rows [0:D] = y, row D = delta_log_py
        yd = (jnp.dot(w23_ref[...], h, preferred_element_type=jnp.float32)
              + b23_ref[...])                                      # (D+1, BN)

        # ---- merged weighted reduction:
        # log_px[b] = const_total - 0.5*sum(y[b]^2) - sum(dlog[b])
        # recon     = -mean_b(log_px) * recon_weight
        #           = base + sum( c_sq*y^2 , c_dl*dlog )
        row = lax.broadcasted_iota(jnp.int32, (D + 1, BN), 0)
        vals = jnp.where(row < D, c_sq * (yd * yd), c_dl * yd)
        recon_ref[0, 0] = jnp.sum(vals) + base

    return kernel


def fused_pointflow_pallas(x_aug, w1, wz, w23, b23, B, N, D, H):
    vmem = pl.BlockSpec(memory_space=pltpu.MemorySpace.VMEM)
    smem = pl.BlockSpec(memory_space=pltpu.MemorySpace.SMEM)
    return pl.pallas_call(
        make_fused_kernel(B, N, D, H),
        out_shape=jax.ShapeDtypeStruct((1, 1), jnp.float32),
        in_specs=[vmem] * 5,
        out_specs=smem,
    )(x_aug, w1, wz, w23, b23)


# ------------------------------ PointFlow.forward -----------------------------
def pointflow_forward(x, params):
    """Mirrors PointFlow.forward(x, opt, step, writer).

    opt.zero_grad() / writer are optimizer / logging side effects with no
    compute equivalent and are ignored.
    Returns (entropy_loss, recon_loss, prior_loss) as float32 scalars.
    """
    # Kernel is specialized to this configuration; flipping either flag would
    # silently change semantics, so guard it.
    assert USE_DETERMINISTIC_ENCODER and not USE_LATENT_FLOW

    B, N, D = x.shape
    H = params["enc_w1"].shape[1]
    BN = B * N

    # ---- wrapper-side layout / weight folding (fp reassociation only) ----
    # Transposed, lane-dense activations: x^T with a homogeneous ones row so
    # biases become weight columns.
    x_t = jnp.transpose(jnp.reshape(x, (BN, D)))                       # (D, BN)
    x_aug = jnp.concatenate([x_t, jnp.ones((1, BN), x.dtype)], axis=0)  # (D+1, BN)

    # z-path bias (enc_bmu @ cnf_wz + cnf_b1) folded into the flow x-path bias
    # column; z-path weight folded into a single (H, H) matmul.
    bz = (params["enc_bmu"] @ params["cnf_wz"] + params["cnf_b1"]).T    # (H, 1)
    w1 = jnp.concatenate(
        [jnp.concatenate([params["enc_w1"].T, params["enc_b1"].T], axis=1),
         jnp.concatenate([params["cnf_w1"].T, bz], axis=1)],
        axis=0)                                                         # (2H, D+1)
    wz = (params["enc_wmu"] @ params["cnf_wz"]).T                       # (H, H)
    w23 = params["cnf_w23"].T                                           # (D+1, H)
    b23 = params["cnf_b23"].T                                           # (D+1, 1)

    recon_loss = fused_pointflow_pallas(x_aug, w1, wz, w23, b23, B, N, D, H)[0, 0]

    # deterministic encoder branch: entropy = zeros(B)
    # use_latent_flow = False branch: log_pz = zeros(B, 1)
    entropy = jnp.zeros((B,), jnp.float32)
    log_pz = jnp.zeros((B, 1), jnp.float32)
    entropy_loss = -jnp.mean(entropy) * ENTROPY_WEIGHT
    prior_loss = -jnp.mean(log_pz) * PRIOR_WEIGHT
    return entropy_loss, recon_loss, prior_loss


# ------------------------------ parameter init --------------------------------
def init_params(key):
    ks = jax.random.split(key, 6)
    s = 0.1
    D, H, Z = INPUT_DIM, HIDDEN, ZDIM
    p = {
        # encoder (sigma head omitted: it is multiplied by 0 in the
        # deterministic-encoder branch and never affects the output)
        "enc_w1":  s * jax.random.normal(ks[0], (D, H), jnp.float32),
        "enc_b1":  jnp.zeros((1, H), jnp.float32),
        "enc_wmu": s * jax.random.normal(ks[1], (H, Z), jnp.float32),
        "enc_bmu": jnp.zeros((1, Z), jnp.float32),
        # conditional point flow; y-head and delta_log_py-head fused: (H, D+1)
        "cnf_w1":  s * jax.random.normal(ks[2], (D, H), jnp.float32),
        "cnf_wz":  s * jax.random.normal(ks[3], (Z, H), jnp.float32),
        "cnf_b1":  jnp.zeros((1, H), jnp.float32),
        "cnf_w23": s * jax.random.normal(ks[4], (H, D + 1), jnp.float32),
        "cnf_b23": jnp.zeros((1, D + 1), jnp.float32),
    }
    return p


# ----------------------------------- main -------------------------------------
if __name__ == "__main__":
    key = jax.random.PRNGKey(0)
    k_x, k_p = jax.random.split(key)
    x = jax.random.normal(k_x, (BATCH, NUM_POINTS, INPUT_DIM), jnp.float32)
    params = init_params(k_p)

    entropy_loss, recon_loss, prior_loss = jax.jit(pointflow_forward)(x, params)
    jax.block_until_ready((entropy_loss, recon_loss, prior_loss))

    assert entropy_loss.shape == () and recon_loss.shape == () and prior_loss.shape == ()
    assert bool(jnp.isfinite(recon_loss))
    print("KERNEL_OK")
</pallas_src>

<mosaic_0001>
module attributes {stable_mosaic.version = 11 : i64} {
  func.func @kernel(%arg0: memref<4x128xf32, #tpu.memory_space<vmem>>, %arg1: memref<64x4xf32, #tpu.memory_space<vmem>>, %arg2: memref<32x32xf32, #tpu.memory_space<vmem>>, %arg3: memref<4x32xf32, #tpu.memory_space<vmem>>, %arg4: memref<4x1xf32, #tpu.memory_space<vmem>>, %arg5: memref<1x1xf32, #tpu.memory_space<smem>>) attributes {dimension_semantics = [], scalar_prefetch = 0 : i64, scratch_operands = 0 : i64, tpu.core_type = #tpu.core_type<tc>} {
    %c0 = arith.constant 0 : index
    %c0_0 = arith.constant 0 : index
    %0 = vector.load %arg0[%c0, %c0_0] : memref<4x128xf32, #tpu.memory_space<vmem>>, vector<4x128xf32>
    %c0_1 = arith.constant 0 : index
    %c0_2 = arith.constant 0 : index
    %1 = vector.load %arg1[%c0_1, %c0_2] : memref<64x4xf32, #tpu.memory_space<vmem>>, vector<64x4xf32>
    %cst = arith.constant dense<0.000000e+00> : vector<64x128xf32>
    %2 = tpu.matmul %1, %0, %cst {dimension_numbers = #tpu.dot_dimension_numbers<[1], [0], [0], [1], [0, 0, 1, 1], [], []>} : vector<64x4xf32>, vector<4x128xf32>, vector<64x128xf32> -> vector<64x128xf32>
    %3 = vector.extract_strided_slice %2 {offsets = [0, 0], sizes = [32, 128], strides = [1, 1]} : vector<64x128xf32> to vector<32x128xf32>
    %cst_3 = arith.constant 0.000000e+00 : f32
    %4 = vector.broadcast %cst_3 : f32 to vector<32x128xf32>
    %5 = arith.maximumf %3, %4 : vector<32x128xf32>
    %6 = vector.extract_strided_slice %2 {offsets = [32, 0], sizes = [32, 128], strides = [1, 1]} : vector<64x128xf32> to vector<32x128xf32>
    %7 = tpu.iota {dimensions = array<i32: 1>} : vector<32x128xi32>
    %cst_4 = arith.constant 0.000000e+00 : f32
    %8 = vector.broadcast %cst_4 : f32 to vector<32x128xf32>
    %c0_i32 = arith.constant 0 : i32
    %9 = vector.broadcast %c0_i32 : i32 to vector<32x128xi32>
    %10 = arith.cmpi sge, %7, %9 : vector<32x128xi32>
    %c64_i32 = arith.constant 64 : i32
    %11 = vector.broadcast %c64_i32 : i32 to vector<32x128xi32>
    %12 = arith.cmpi slt, %7, %11 : vector<32x128xi32>
    %13 = arith.andi %10, %12 : vector<32x128xi1>
    %cst_5 = arith.constant 0xFF800000 : f32
    %14 = vector.broadcast %cst_5 : f32 to vector<32x128xf32>
    %15 = arith.select %13, %5, %14 : vector<32x128xi1>, vector<32x128xf32>
    %cst_6 = arith.constant dense<0xFF800000> : vector<32xf32>
    %16 = vector.multi_reduction <maximumf>, %15, %cst_6 [1] : vector<32x128xf32> to vector<32xf32>
    %17 = vector.shape_cast %16 : vector<32xf32> to vector<32x1xf32>
    %18 = vector.shape_cast %17 : vector<32x1xf32> to vector<32x1xf32>
    %19 = vector.broadcast %18 : vector<32x1xf32> to vector<32x128xf32>
    %20 = arith.select %13, %19, %8 : vector<32x128xi1>, vector<32x128xf32>
    %c64_i32_7 = arith.constant 64 : i32
    %21 = vector.broadcast %c64_i32_7 : i32 to vector<32x128xi32>
    %22 = arith.cmpi sge, %7, %21 : vector<32x128xi32>
    %c128_i32 = arith.constant 128 : i32
    %23 = vector.broadcast %c128_i32 : i32 to vector<32x128xi32>
    %24 = arith.cmpi slt, %7, %23 : vector<32x128xi32>
    %25 = arith.andi %22, %24 : vector<32x128xi1>
    %cst_8 = arith.constant 0xFF800000 : f32
    %26 = vector.broadcast %cst_8 : f32 to vector<32x128xf32>
    %27 = arith.select %25, %5, %26 : vector<32x128xi1>, vector<32x128xf32>
    %cst_9 = arith.constant dense<0xFF800000> : vector<32xf32>
    %28 = vector.multi_reduction <maximumf>, %27, %cst_9 [1] : vector<32x128xf32> to vector<32xf32>
    %29 = vector.shape_cast %28 : vector<32xf32> to vector<32x1xf32>
    %30 = vector.shape_cast %29 : vector<32x1xf32> to vector<32x1xf32>
    %31 = vector.broadcast %30 : vector<32x1xf32> to vector<32x128xf32>
    %32 = arith.select %25, %31, %20 : vector<32x128xi1>, vector<32x128xf32>
    %c0_10 = arith.constant 0 : index
    %c0_11 = arith.constant 0 : index
    %33 = vector.load %arg2[%c0_10, %c0_11] : memref<32x32xf32, #tpu.memory_space<vmem>>, vector<32x32xf32>
    %cst_12 = arith.constant dense<0.000000e+00> : vector<32x128xf32>
    %34 = tpu.matmul %33, %32, %cst_12 {dimension_numbers = #tpu.dot_dimension_numbers<[1], [0], [0], [1], [0, 0, 1, 1], [], []>} : vector<32x32xf32>, vector<32x128xf32>, vector<32x128xf32> -> vector<32x128xf32>
    %35 = arith.addf %6, %34 : vector<32x128xf32>
    %36 = math.tanh %35 : vector<32x128xf32>
    %c0_13 = arith.constant 0 : index
    %c0_14 = arith.constant 0 : index
    %37 = vector.load %arg3[%c0_13, %c0_14] : memref<4x32xf32, #tpu.memory_space<vmem>>, vector<4x32xf32>
    %cst_15 = arith.constant dense<0.000000e+00> : vector<4x128xf32>
    %38 = tpu.matmul %37, %36, %cst_15 {dimension_numbers = #tpu.dot_dimension_numbers<[1], [0], [0], [1], [0, 0, 1, 1], [], []>} : vector<4x32xf32>, vector<32x128xf32>, vector<4x128xf32> -> vector<4x128xf32>
    %c0_16 = arith.constant 0 : index
    %c0_17 = arith.constant 0 : index
    %39 = vector.load %arg4[%c0_16, %c0_17] : memref<4x1xf32, #tpu.memory_space<vmem>>, vector<4x1xf32>
    %40 = vector.broadcast %39 : vector<4x1xf32> to vector<4x128xf32>
    %41 = arith.addf %38, %40 : vector<4x128xf32>
    %42 = tpu.iota {dimensions = array<i32: 0>} : vector<4x128xi32>
    %c3_i32 = arith.constant 3 : i32
    %43 = vector.broadcast %c3_i32 : i32 to vector<4x128xi32>
    %44 = arith.cmpi slt, %42, %43 : vector<4x128xi32>
    %45 = arith.mulf %41, %41 : vector<4x128xf32>
    %cst_18 = arith.constant 2.500000e-01 : f32
    %46 = vector.broadcast %cst_18 : f32 to vector<4x128xf32>
    %47 = arith.mulf %46, %45 : vector<4x128xf32>
    %cst_19 = arith.constant 5.000000e-01 : f32
    %48 = vector.broadcast %cst_19 : f32 to vector<4x128xf32>
    %49 = arith.mulf %48, %41 : vector<4x128xf32>
    %50 = arith.select %44, %47, %49 : vector<4x128xi1>, vector<4x128xf32>
    %51 = vector.shape_cast %50 : vector<4x128xf32> to vector<1x4x128xf32>
    %cst_20 = arith.constant dense<0.000000e+00> : vector<1xf32>
    %52 = vector.multi_reduction <add>, %51, %cst_20 [1, 2] : vector<1x4x128xf32> to vector<1xf32>
    %53 = vector.shape_cast %52 : vector<1xf32> to vector<1x1x1xf32>
    %54 = vector.extract %53[0, 0, 0] : f32 from vector<1x1x1xf32>
    %cst_21 = arith.constant 529.308594 : f32
    %55 = arith.addf %54, %cst_21 : f32
    %c0_22 = arith.constant 0 : index
    %c0_23 = arith.constant 0 : index
    %56 = memref.load %arg5[%c0_22, %c0_23] : memref<1x1xf32, #tpu.memory_space<smem>>
    memref.store %55, %arg5[%c0_22, %c0_23] : memref<1x1xf32, #tpu.memory_space<smem>>
    return
  }
}

</mosaic_0001>

<llo_original>
// kernel: pointflow_forward.1
$region0: #{pointflow_forward.1}
  #allocation0 [shape = 'u32[]', space=smem, size = 0x4, offset = 0x4, fixed_abs, tag = 'smem constant byte address 0x4 - core index']
  #allocation1 [shape = 'u32[72,128]{1,0:T(1,128)}', space=vmem, size = 0x9000, scoped, tag = 'internal scratch']
  %s0 = inlined_call_operand.vmem [shape: f32[4,128], index: 0, kind: input, shape index: {}]
  %s1 = inlined_call_operand.vmem [shape: f32[64,4], index: 1, kind: input, shape index: {}]
  %s2 = inlined_call_operand.vmem [shape: f32[32,32], index: 2, kind: input, shape index: {}]
  %s3 = inlined_call_operand.vmem [shape: f32[4,32], index: 3, kind: input, shape index: {}]
  %s4 = inlined_call_operand.vmem [shape: f32[4,1], index: 4, kind: input, shape index: {}]
  %s5 = inlined_call_operand.hbm [shape: f32[1,1], index: 5, kind: output, shape index: {}]
  %s6 = sld [smem:[#allocation0]]
  $region30: #{pointflow_forward.1} parent=0
    _
  %s8 = ssub.s32 1, %s6
  %s9 = scalar_select 0, %s8, %s6
  $region1: #{pointflow_forward.1} parent=0
    #allocation2 [shape = 'u8[512]{0}', space=smem, size = 0x200, scoped, tag = 'output window, operand 0, single buffered']
    #allocation3 [shape = 's32[1]{0}', space=sflag, size = 0x4, scoped, tag = 'scoped memory for pointflow_forward.1']
    %10 = vsyncpa [#allocation3], 0
    // Predicated region
    $region2: #{pointflow_forward.1} parent=1 // pred_check
      _
    $region3: #{pointflow_forward.1} parent=1 // pred_check_branch
      %12 = sbr.rel (0) target = $region5
    $region4: #{pointflow_forward.1} parent=1 // pred_region
      _
    $region5: #{pointflow_forward.1} parent=1 // pred_fallthru
      _
    // Predicated region
    $region6: #{pointflow_forward.1} parent=1 // pred_check
      _
    $region7: #{pointflow_forward.1} parent=1 // pred_check_branch
      %14 = sbr.rel (0) target = $region9
    $region8: #{pointflow_forward.1} parent=1 // pred_region
      _
    $region9: #{pointflow_forward.1} parent=1 // pred_fallthru
      _
    // Predicated region
    $region10: #{pointflow_forward.1} parent=1 // pred_check
      _
    $region11: #{pointflow_forward.1} parent=1 // pred_check_branch
      %16 = sbr.rel (0) target = $region13
    $region12: #{pointflow_forward.1} parent=1 // pred_region
      _
    $region13: #{pointflow_forward.1} parent=1 // pred_fallthru
      _
    // Predicated region
    $region14: #{pointflow_forward.1} parent=1 // pred_check
      _
    $region15: #{pointflow_forward.1} parent=1 // pred_check_branch
      %18 = sbr.rel (0) target = $region17
    $region16: #{pointflow_forward.1} parent=1 // pred_region
      _
    $region17: #{pointflow_forward.1} parent=1 // pred_fallthru
      _
    // Predicated region
    $region18: #{pointflow_forward.1} parent=1 // pred_check
      _
    $region19: #{pointflow_forward.1} parent=1 // pred_check_branch
      %20 = sbr.rel (0) target = $region21
    $region20: #{pointflow_forward.1} parent=1 // pred_region
      _
    $region21: #{pointflow_forward.1} parent=1 // pred_fallthru
      _
    %v21 = vld [vmem:[%s0] sm:$0xf]
    %v22 = vld [vmem:[%s1] sm:$0xff]
    %v23 = vld [vmem:[%s1 + $0x8] sm:$0xff]
    %v24 = vld [vmem:[%s1 + $0x10] sm:$0xff]
    %v25 = vld [vmem:[%s1 + $0x18] sm:$0xff]
    %v26 = vld [vmem:[%s1 + $0x20] sm:$0xff]
    %v27 = vld [vmem:[%s1 + $0x28] sm:$0xff]
    %v28 = vld [vmem:[%s1 + $0x30] sm:$0xff]
    %v29 = vld [vmem:[%s1 + $0x38] sm:$0xff]
    %vm30 = vcmask 31744
    %v32 = vsel %vm30, %v22, 0
    %v35 = vsel %vm30, %v23, 0
    %v38 = vsel %vm30, %v24, 0
    %v41 = vsel %vm30, %v25, 0
    %v44 = vsel %vm30, %v26, 0
    %v47 = vsel %vm30, %v27, 0
    %v50 = vsel %vm30, %v28, 0
    %v53 = vsel %vm30, %v29, 0
    %vm55 = vcmask 1043456
    %v57 = vsel %vm55, %v21, 0
    %59 = vmatpush.msra.mxu0 0.0
    %60 = vmatpush.msra.mxu0 0.0
    %61 = vmatpush.msra.mxu0 0.0
    %62 = vmatpush.msra.mxu0 0.0
    %63 = vmatpush.msra.mxu0 0.0
    %64 = vmatpush.msra.mxu0 0.0
    %65 = vmatpush.msra.mxu0 0.0
    %66 = vmatpush.msra.mxu0 0.0
    %67 = vmatpush.msra.mxu0 0.0
    %68 = vmatpush.msra.mxu0 0.0
    %69 = vmatpush.msra.mxu0 0.0
    %70 = vmatpush.msra.mxu0 0.0
    %71 = vmatpush.msra.mxu0 0.0
    %72 = vmatpush.msra.mxu0 0.0
    %73 = vmatpush.msra.mxu0 0.0
    %74 = vmatpush.msra.mxu0 %v57
    %75 = vmatmul.f32.gmra.mxu0 %v32
    %v76 = vpop.f32.mrf.mxu0
    %v77 = vadd.f32 0.0, %v76
    %78 = vmatmul.f32.gmra.mxu0 %v35
    %v79 = vpop.f32.mrf.mxu0
    %v80 = vadd.f32 0.0, %v79
    %81 = vmatmul.f32.gmra.mxu0 %v38
    %v82 = vpop.f32.mrf.mxu0
    %v83 = vadd.f32 0.0, %v82
    %84 = vmatmul.f32.gmra.mxu0 %v41
    %v85 = vpop.f32.mrf.mxu0
    %v86 = vadd.f32 0.0, %v85
    %87 = vmatmul.f32.gmra.mxu0 %v44
    %v88 = vpop.f32.mrf.mxu0
    %v89 = vadd.f32 0.0, %v88
    %90 = vmatmul.f32.gmra.mxu0 %v47
    %v91 = vpop.f32.mrf.mxu0
    %v92 = vadd.f32 0.0, %v91
    %93 = vmatmul.f32.gmra.mxu0 %v50
    %v94 = vpop.f32.mrf.mxu0
    %v95 = vadd.f32 0.0, %v94
    %96 = vmatmul.f32.gmra.mxu0 %v53
    %v97 = vpop.f32.mrf.mxu0
    %v98 = vadd.f32 0.0, %v97
    %99 = vdwg.mxu0
    %v100 = vmax.f32 %v77, 0.0
    %v101 = vmax.f32 %v80, 0.0
    %v102 = vmax.f32 %v83, 0.0
    %v103 = vmax.f32 %v86, 0.0
    %v104 = vlaneseq
    %v105 = vand.u32 %v104, 127
    %vm106 = vcmp.ge.s32.totalorder %v105, 0
    %vm107 = vcmp.lt.s32.totalorder %v105, 64
    %vm108 = vmand %vm106, %vm107
    %v109 = vsel %vm108, %v100, -inf
    %v110 = vsel %vm108, %v101, -inf
    %v111 = vsel %vm108, %v102, -inf
    %v112 = vsel %vm108, %v103, -inf
    %113 = vmax.xlane.f32.xlu0 %v109
    %v114 = vpop.xlane.xlu0 %113
    %115 = vmax.xlane.f32.xlu0 %v110
    %v116 = vpop.xlane.xlu0 %115
    %117 = vmax.xlane.f32.xlu0 %v111
    %v118 = vpop.xlane.xlu0 %117
    %119 = vmax.xlane.f32.xlu0 %v112
    %v120 = vpop.xlane.xlu0 %119
    %v121 = vsel %vm108, %v114, 0.0
    %v122 = vsel %vm108, %v116, 0.0
    %v123 = vsel %vm108, %v118, 0.0
    %v124 = vsel %vm108, %v120, 0.0
    %vm125 = vcmp.ge.s32.totalorder %v105, 64
    %vm126 = vcmp.lt.s32.totalorder %v105, 128
    %vm127 = vmand %vm125, %vm126
    %v128 = vsel %vm127, %v100, -inf
    %v129 = vsel %vm127, %v101, -inf
    %v130 = vsel %vm127, %v102, -inf
    %v131 = vsel %vm127, %v103, -inf
    %132 = vmax.xlane.f32.xlu0 %v128
    %v133 = vpop.xlane.xlu0 %132
    %134 = vmax.xlane.f32.xlu0 %v129
    %v135 = vpop.xlane.xlu0 %134
    %136 = vmax.xlane.f32.xlu0 %v130
    %v137 = vpop.xlane.xlu0 %136
    %138 = vmax.xlane.f32.xlu0 %v131
    %v139 = vpop.xlane.xlu0 %138
    %v140 = vsel %vm127, %v133, %v121
    %v141 = vsel %vm127, %v135, %v122
    %v142 = vsel %vm127, %v137, %v123
    %v143 = vsel %vm127, %v139, %v124
    %v144 = vld [vmem:[%s2] sm:$0xff]
    %v145 = vld [vmem:[%s2 + $0x8] sm:$0xff]
    %v146 = vld [vmem:[%s2 + $0x10] sm:$0xff]
    %v147 = vld [vmem:[%s2 + $0x18] sm:$0xff]
    %vm148 = vcmask 261120
    %v150 = vsel %vm148, %v144, 0
    %v153 = vsel %vm148, %v145, 0
    %v156 = vsel %vm148, %v146, 0
    %v159 = vsel %vm148, %v147, 0
    %161 = vmatpush.msra.mxu0 0.0
    %162 = vmatpush.msra.mxu0 0.0
    %163 = vmatpush.msra.mxu0 0.0
    %164 = vmatpush.msra.mxu0 0.0
    %165 = vmatpush.msra.mxu0 0.0
    %166 = vmatpush.msra.mxu0 0.0
    %167 = vmatpush.msra.mxu0 0.0
    %168 = vmatpush.msra.mxu0 0.0
    %169 = vmatpush.msra.mxu0 0.0
    %170 = vmatpush.msra.mxu0 0.0
    %171 = vmatpush.msra.mxu0 0.0
    %172 = vmatpush.msra.mxu0 0.0
    %173 = vmatpush.msra.mxu0 %v143
    %174 = vmatpush.msra.mxu0 %v142
    %175 = vmatpush.msra.mxu0 %v141
    %176 = vmatpush.msra.mxu0 %v140
    %177 = vmatmul.f32.gmra.mxu0 %v150
    %v178 = vpop.f32.mrf.mxu0
    %v179 = vadd.f32 0.0, %v178
    %180 = vmatmul.f32.gmra.mxu0 %v153
    %v181 = vpop.f32.mrf.mxu0
    %v182 = vadd.f32 0.0, %v181
    %183 = vmatmul.f32.gmra.mxu0 %v156
    %v184 = vpop.f32.mrf.mxu0
    %v185 = vadd.f32 0.0, %v184
    %186 = vmatmul.f32.gmra.mxu0 %v159
    %v187 = vpop.f32.mrf.mxu0
    %v188 = vadd.f32 0.0, %v187
    %189 = vdwg.mxu0
    %v190 = vadd.f32 %v89, %v179
    %v191 = vadd.f32 %v92, %v182
    %v192 = vadd.f32 %v95, %v185
    %v193 = vadd.f32 %v98, %v188
    %v194 = vtanh.pop %v190
    %v195 = vtanh.pop %v191
    %v196 = vtanh.pop %v192
    %v197 = vtanh.pop %v193
    %v198 = vld [vmem:[%s3] sm:$0xf]
    %v199 = vld [vmem:[%s4] sm:$0xf]
    %201 = vset.pattern.permute.xlu0 0
    %202 = vperm.xlu0 %201, %v199
    %v203 = vpop.permute.xlu0 %202
    %v206 = vsel %vm148, %v198, 0
    %208 = vmatpush.msra.mxu0 0.0
    %209 = vmatpush.msra.mxu0 0.0
    %210 = vmatpush.msra.mxu0 0.0
    %211 = vmatpush.msra.mxu0 0.0
    %212 = vmatpush.msra.mxu0 0.0
    %213 = vmatpush.msra.mxu0 0.0
    %214 = vmatpush.msra.mxu0 0.0
    %215 = vmatpush.msra.mxu0 0.0
    %216 = vmatpush.msra.mxu0 0.0
    %217 = vmatpush.msra.mxu0 0.0
    %218 = vmatpush.msra.mxu0 0.0
    %219 = vmatpush.msra.mxu0 0.0
    %220 = vmatpush.msra.mxu0 %v197
    %221 = vmatpush.msra.mxu0 %v196
    %222 = vmatpush.msra.mxu0 %v195
    %223 = vmatpush.msra.mxu0 %v194
    %224 = vmatmul.f32.gmra.mxu0 %v206
    %v225 = vpop.f32.mrf.mxu0
    %v226 = vadd.f32 %v203, %v225
    %227 = vdwg.mxu0
    %v228 = vlaneseq
    %v229 = vshrl.u32 %v228, 7
    %vm230 = vcmp.lt.s32.totalorder %v229, 3
    %v231 = vmul.f32 %v226, %v226
    %v232 = vmul.f32 %v231, 0.25
    %v233 = vmul.f32 %v226, 0.5
    %v234 = vsel %vm230, %v232, %v233
    %v235 = vsel %vm55, %v234, 0.0
    %236 = vadd.xlane.f32.xlu0 %v235
    %v237 = vpop.xlane.xlu0 %236
    %v238 = vrot.slane %v237, 4
    %v239 = vadd.f32 %v237, %v238
    %v240 = vrot.slane %v239, 2
    %v241 = vadd.f32 %v239, %v240
    %v242 = vrot.slane %v241, 1
    %v243 = vadd.f32 %v241, %v242
    %s244 = vtos %v243
    %s245 = sadd.f32 %s244, 529.3086
    %s246 = scalar_lea.smem [#allocation2], 0
    %247 = sst [smem:[%s246]] %s245
    // Predicated region
    $region22: #{pointflow_forward.1} parent=1 // pred_check
      _
    $region23: #{pointflow_forward.1} parent=1 // pred_check_branch
      %249 = sbr.rel (0) target = $region25
    $region24: #{pointflow_forward.1} parent=1 // pred_region
      %251 = vsyncadd [#allocation3], 0
      %s253 = sshll.u32 %s5, 4
      %s254 = int_to_ptr.hbm [resolvable:$true] %s253
      %256 = dma.smem_to_hbm [#allocation2], 16, %s254, [#allocation3]
    $region25: #{pointflow_forward.1} parent=1 // pred_fallthru
      _
    // Predicated region
    $region26: #{pointflow_forward.1} parent=1 // pred_check
      _
    $region27: #{pointflow_forward.1} parent=1 // pred_check_branch
      %258 = sbr.rel (0) target = $region29
    $region28: #{pointflow_forward.1} parent=1 // pred_region
      %260 = dma.done [#allocation3], 16
    $region29: #{pointflow_forward.1} parent=1 // pred_fallthru
      _
    %261 = sfence
    %262 = vsyncpa [#allocation3], 1

</llo_original>
